<compile_context>
chip_gen: v5e
topology: v5e:2x2
jax: 0.10.0
libtpu: 0.0.40
codegen_flags: <defaults>
</compile_context>

<pallas_src>
import math

import jax
import jax.numpy as jnp
import numpy as np
from jax.experimental import pallas as pl
from jax.experimental.pallas import tpu as pltpu


def _round_up(x, m):
    return ((x + m - 1) // m) * m


def _att_inter_agg_kernel(n_ref, self_ref, neigh_ref, wT_ref, a_ref,
                          clf_wT_ref, clf_b_ref,
                          comb_ref, attsum_ref, scores_ref):
    f32, bf16 = jnp.float32, jnp.bfloat16
    tile_n, Fd = self_ref.shape
    R = neigh_ref.shape[0]

    x_f32 = self_ref[...]                         # (tile_n, F) f32 straight from HBM
    x = x_f32.astype(bf16)                        # in-kernel cast (VPU) -> MXU-native
    wT = wT_ref[...]                              # (F, E) bf16, resident across tiles

    # center_h = self_feats @ W^T   (MXU, bf16 in / f32 acc)
    center_h = jnp.dot(x, wT, preferred_element_type=f32)             # (tile_n, E)

    # Fused neighbor transform: collapse (R, tile_n, F) -> (R*tile_n, F) while
    # still f32 (tile_n % 8 == 0 -> layout-preserving collapse), cast, then one
    # tall MXU matmul.  Center/clf dots stay separate: fusing them would need an
    # in-VMEM concatenate copy that costs more than the 32x32 weight re-push.
    neigh_flat = neigh_ref[...].reshape(R * tile_n, Fd).astype(bf16)
    neigh_h = jnp.dot(neigh_flat, wT, preferred_element_type=f32)     # (R*tile_n, E)

    # combined.mm(a) decomposes into two row-reductions; keep them on VPU/XLU
    # (N=1 MXU matmuls waste 127/128 of the array and force masked stores).
    a_center = a_ref[0:1, :]                                          # (1, E) f32
    a_neigh = a_ref[1:2, :]                                           # (1, E) f32
    e_center = jnp.sum(center_h * a_center, axis=-1, keepdims=True)   # (tile_n, 1)
    e_neigh = jnp.sum(neigh_h * a_neigh, axis=-1, keepdims=True)      # (R*tile_n, 1)

    e_cols = []
    for r in range(R):                            # R small & static -> unrolled
        e_r = e_center + e_neigh[r * tile_n:(r + 1) * tile_n, :]
        e_r = jnp.where(e_r > 0, e_r, f32(0.2) * e_r)   # LeakyReLU(0.2)
        e_cols.append(e_r)
    attention = jnp.concatenate(e_cols, axis=1)                       # (tile_n, R)

    # softmax over relations (dim=1)
    m = jnp.max(attention, axis=1, keepdims=True)
    ex = jnp.exp(attention - m)
    ori_attention = ex / jnp.sum(ex, axis=1, keepdims=True)           # (tile_n, R)

    # TODO(synk): F.dropout(p=0.6) on the attention is skipped — the kernel
    # reproduces eval-mode semantics (training=False => dropout is identity).

    # aggregated = sum_r attn[:, r] * neigh_h[r]
    aggregated = jnp.zeros_like(center_h)
    for r in range(R):
        aggregated = aggregated + (ori_attention[:, r:r + 1] *
                                   neigh_h[r * tile_n:(r + 1) * tile_n, :])

    # combined emitted directly in the torch (E, n) layout: the in-kernel XLU
    # transpose makes the store lane-dense (lane dim = tile_n) and removes the
    # wrapper-side transpose pass over the whole output.
    comb_ref[...] = jnp.maximum(center_h + aggregated, f32(0.0)).T

    # Per-tile masked column-sum of the attention (a tiny (1,1,R) write instead
    # of an (n,R) slab); cross-tile sum + softmax happens in the wrapper.
    # where-mask (not multiply) so garbage read from the out-of-bounds rows of a
    # ragged last tile (possibly inf/nan) can never leak into the sum.
    rows = pl.program_id(0) * tile_n + jax.lax.broadcasted_iota(
        jnp.int32, (tile_n, R), 0)
    att_masked = jnp.where(rows < n_ref[0], ori_attention, f32(0.0))
    attsum_ref[...] = jnp.sum(att_masked, axis=0, keepdims=True).reshape(1, 1, R)

    # center_scores = label_clf(self_feats), kept fully in f32: these feed the
    # RL threshold logic downstream and the extra precision is free at N=2.
    scores_ref[...] = (jnp.dot(x_f32, clf_wT_ref[...], preferred_element_type=f32)
                       + clf_b_ref[...])


def inter_agg_att(self_feats, neigh_feats, weight, a, clf_w, clf_b, *, tile_n=None):
    """Pallas implementation of InterAgg's 'Att' forward hot path.

    self_feats : (n, F), neigh_feats : (R*n, F), weight : (E, F),
    a : (2E, 1), clf_w : (2, F), clf_b : (2,)
    returns (combined (E, n), att (R,), center_scores (n, 2))
    """
    f32, bf16 = jnp.float32, jnp.bfloat16
    n, Fd = self_feats.shape
    E = weight.shape[0]
    R = neigh_feats.shape[0] // n
    neigh3 = neigh_feats.reshape(R, n, Fd)        # free view, no copy

    if tile_n is None:
        if n >= 128:
            # HBM-bound regime (F=E=32): large row tiles amortize the ~0.35us
            # per-grid-step overhead; cap at ~n/4 so the "parallel" grid axis can
            # still shard across v7x's two TensorCores, and at 1024 which keeps
            # per-tile VMEM (~a few MiB with double-buffering) far under the
            # v7x 64 MiB / 32 MiB-scoped budget on every generation.
            tile_n = min(1024,
                         max(128, (n // 4) // 128 * 128),
                         _round_up(n, 128))
        else:
            tile_n = _round_up(n, 8)

    if n >= 128:
        assert tile_n % 128 == 0
        # No host-side pad / cast passes: grid = cdiv(n, tile_n); the ragged
        # last tile is handled by Pallas block padding + in-kernel masking.
        n_arr = n
        self_in, neigh_in = self_feats, neigh3
    else:
        # Tiny-batch path: pad by <=7 rows so the in-kernel sublane collapse of
        # the neighbor block stays layout-preserving.  Cost is negligible.
        n_arr = tile_n
        pad = n_arr - n
        self_in = jnp.pad(self_feats, ((0, pad), (0, 0))) if pad else self_feats
        neigh_in = jnp.pad(neigh3, ((0, 0), (0, pad), (0, 0))) if pad else neigh3

    num_tiles = (n_arr + tile_n - 1) // tile_n

    n_scalar = jnp.array([n], jnp.int32)          # prefetched into SMEM
    wT = weight.T.astype(bf16)                    # (F, E), transposed once on host
    a_rows = a.reshape(2, E).astype(f32)          # row0 = a[:E], row1 = a[E:]
    clf_wT = clf_w.T.astype(f32)                  # (F, 2), f32 label_clf
    clf_b2 = clf_b.reshape(1, 2).astype(f32)

    flops = (2 * (R + 1) * n_arr * Fd * E         # feature transforms (MXU)
             + 2 * n_arr * Fd * 2                 # label_clf
             + 2 * (R + 1) * n_arr * E            # attention row-reductions
             + 4 * n_arr * R * E)                 # aggregation + combine
    transcendentals = n_arr * R
    bytes_accessed = (4 * (R + 1) * n_arr * Fd    # f32 feature reads
                      + 2 * Fd * E + 4 * (2 * E + 2 * Fd + 2)
                      + 4 * (E * n_arr + num_tiles * R + 2 * n_arr))

    grid_spec = pltpu.PrefetchScalarGridSpec(
        num_scalar_prefetch=1,
        grid=(num_tiles,),
        in_specs=[
            pl.BlockSpec((tile_n, Fd), lambda i, n_ref: (i, 0)),        # self feats
            pl.BlockSpec((R, tile_n, Fd), lambda i, n_ref: (0, i, 0)),  # neigh feats
            pl.BlockSpec((Fd, E), lambda i, n_ref: (0, 0)),             # W^T
            pl.BlockSpec((2, E), lambda i, n_ref: (0, 0)),              # a rows
            pl.BlockSpec((Fd, 2), lambda i, n_ref: (0, 0)),             # clf W^T
            pl.BlockSpec((1, 2), lambda i, n_ref: (0, 0)),              # clf b
        ],
        out_specs=[
            pl.BlockSpec((E, tile_n), lambda i, n_ref: (0, i)),         # combined
            pl.BlockSpec((1, 1, R), lambda i, n_ref: (i, 0, 0)),        # att sums
            pl.BlockSpec((tile_n, 2), lambda i, n_ref: (i, 0)),         # scores
        ],
    )

    comb, attsum, scores = pl.pallas_call(
        _att_inter_agg_kernel,
        out_shape=(
            jax.ShapeDtypeStruct((E, n_arr), f32),         # combined, torch layout
            jax.ShapeDtypeStruct((num_tiles, 1, R), f32),  # per-tile att col-sums
            jax.ShapeDtypeStruct((n_arr, 2), f32),         # center scores
        ),
        grid_spec=grid_spec,
        compiler_params=pltpu.CompilerParams(
            dimension_semantics=("parallel",),
            vmem_limit_bytes=32 * 1024 * 1024,
        ),
        cost_estimate=pl.CostEstimate(
            flops=int(flops),
            transcendentals=int(transcendentals),
            bytes_accessed=int(bytes_accessed),
        ),
    )(n_scalar, self_in, neigh_in, wT, a_rows, clf_wT, clf_b2)

    # Cross-tile reduction + softmax for the relation attention weights.
    att = jax.nn.softmax(jnp.sum(attsum, axis=(0, 1)), axis=0)        # (R,)
    if n_arr != n:                                                    # tiny-batch only
        comb = comb[:, :n]
        scores = scores[:n]
    return comb, att, scores


def _reference(self_feats, neigh_feats, weight, a, clf_w, clf_b):
    """Pure-JAX mirror of torch att_inter_agg (eval mode), using the same
    bf16-matmul-input / f32-accumulation choice as the kernel (f32 label_clf)."""
    f32, bf16 = jnp.float32, jnp.bfloat16
    n = self_feats.shape[0]
    E = weight.shape[0]
    R = neigh_feats.shape[0] // n
    x = self_feats.astype(bf16)
    nf = neigh_feats.astype(bf16)
    wT = weight.T.astype(bf16)
    center_h = jnp.dot(x, wT, preferred_element_type=f32)
    neigh_h = jnp.dot(nf, wT, preferred_element_type=f32)
    a_c = a[:E, 0].astype(f32)
    a_n = a[E:, 0].astype(f32)
    e_center = jnp.sum(center_h * a_c[None, :], axis=-1, keepdims=True)
    e_neigh = jnp.sum(neigh_h * a_n[None, :], axis=-1, keepdims=True)
    e = jnp.tile(e_center, (R, 1)) + e_neigh
    e = jnp.where(e > 0, e, 0.2 * e)
    attention = jnp.concatenate([e[r * n:(r + 1) * n] for r in range(R)], axis=1)
    ori = jax.nn.softmax(attention, axis=1)
    agg = jnp.zeros((n, E), f32)
    for r in range(R):
        agg = agg + ori[:, r:r + 1] * neigh_h[r * n:(r + 1) * n]
    comb = jax.nn.relu((center_h + agg).T)
    att = jax.nn.softmax(jnp.sum(ori, axis=0), axis=0)
    scores = jnp.dot(self_feats, clf_w.T, preferred_element_type=f32) + clf_b
    return comb, att, scores


if __name__ == "__main__":
    # Shapes consistent with the module: 3 relations, feat_dim == embed_dim == 32.
    Fd, E, R = 32, 32, 3

    def make_inputs(n, seed=0):
        key = jax.random.PRNGKey(seed)
        k0, k1, k2, k3, k4, k5 = jax.random.split(key, 6)
        self_feats = jax.random.normal(k0, (n, Fd), jnp.float32)
        neigh_feats = jax.random.normal(k1, (R * n, Fd), jnp.float32)
        # Deterministic parameter init (xavier_uniform for weight/a, linear clf).
        bw = math.sqrt(6.0 / (E + Fd))
        weight = jax.random.uniform(k2, (E, Fd), jnp.float32, -bw, bw)
        ba = math.sqrt(6.0 / (2 * E + 1))
        a = jax.random.uniform(k3, (2 * E, 1), jnp.float32, -ba, ba)
        bc = 1.0 / math.sqrt(Fd)
        clf_w = jax.random.uniform(k4, (2, Fd), jnp.float32, -bc, bc)
        clf_b = jax.random.uniform(k5, (2,), jnp.float32, -bc, bc)
        return self_feats, neigh_feats, weight, a, clf_w, clf_b

    # n=8  : tiny single-tile path.
    # n=200: multi-tile path with a ragged last tile (exercises the in-kernel
    #        out-of-bounds row masking of the attention reduction).
    for n in (8, 200):
        args = make_inputs(n)
        comb, att, scores = inter_agg_att(*args)
        jax.block_until_ready((comb, att, scores))

        comb_r, att_r, scores_r = _reference(*args)
        np.testing.assert_allclose(np.asarray(comb), np.asarray(comb_r),
                                   rtol=2e-3, atol=1e-3)
        np.testing.assert_allclose(np.asarray(att), np.asarray(att_r),
                                   rtol=2e-3, atol=1e-3)
        # Looser bound for scores: covers the MXU f32-pass vs. XLA default
        # precision difference for the f32 label_clf matmul.
        np.testing.assert_allclose(np.asarray(scores), np.asarray(scores_r),
                                   rtol=1e-2, atol=1e-2)

    print("KERNEL_OK")
</pallas_src>

<mosaic_0001>
module attributes {stable_mosaic.version = 11 : i64} {
  func.func @_att_inter_agg_kernel(%arg0: i32, %arg1: memref<1xi32, #tpu.memory_space<smem>>, %arg2: memref<8x32xf32, #tpu.memory_space<vmem>>, %arg3: memref<3x8x32xf32, #tpu.memory_space<vmem>>, %arg4: memref<32x32xbf16, #tpu.memory_space<vmem>>, %arg5: memref<2x32xf32, #tpu.memory_space<vmem>>, %arg6: memref<32x2xf32, #tpu.memory_space<vmem>>, %arg7: memref<1x2xf32, #tpu.memory_space<vmem>>, %arg8: memref<32x8xf32, #tpu.memory_space<vmem>>, %arg9: memref<1x1x3xf32, #tpu.memory_space<vmem>>, %arg10: memref<8x2xf32, #tpu.memory_space<vmem>>) attributes {dimension_semantics = [#tpu.dimension_semantics<parallel>], iteration_bounds = array<i64: 1>, scalar_prefetch = 1 : i64, scratch_operands = 0 : i64, tpu.core_type = #tpu.core_type<tc>, window_params = [{transform_indices = @transform_0, window_bounds = array<i64: 8, 32>}, {transform_indices = @transform_1, window_bounds = array<i64: 3, 8, 32>}, {pipeline_mode = #tpu.pipeline_mode<synchronous>, transform_indices = @transform_2, window_bounds = array<i64: 32, 32>}, {pipeline_mode = #tpu.pipeline_mode<synchronous>, transform_indices = @transform_3, window_bounds = array<i64: 2, 32>}, {pipeline_mode = #tpu.pipeline_mode<synchronous>, transform_indices = @transform_4, window_bounds = array<i64: 32, 2>}, {pipeline_mode = #tpu.pipeline_mode<synchronous>, transform_indices = @transform_5, window_bounds = array<i64: 1, 2>}, {transform_indices = @transform_6, window_bounds = array<i64: 32, 8>}, {transform_indices = @transform_7, window_bounds = array<i64: 1, 1, 3>}, {transform_indices = @transform_8, window_bounds = array<i64: 8, 2>}]} {
    %c0 = arith.constant 0 : index
    %c0_0 = arith.constant 0 : index
    %0 = vector.load %arg2[%c0, %c0_0] : memref<8x32xf32, #tpu.memory_space<vmem>>, vector<8x32xf32>
    %1 = arith.truncf %0 : vector<8x32xf32> to vector<8x32xbf16>
    %c0_1 = arith.constant 0 : index
    %c0_2 = arith.constant 0 : index
    %2 = vector.load %arg4[%c0_1, %c0_2] : memref<32x32xbf16, #tpu.memory_space<vmem>>, vector<32x32xbf16>
    %cst = arith.constant dense<0.000000e+00> : vector<8x32xf32>
    %3 = tpu.matmul %1, %2, %cst {dimension_numbers = #tpu.dot_dimension_numbers<[1], [0], [0], [1], [0, 0, 1, 1], [], []>} : vector<8x32xbf16>, vector<32x32xbf16>, vector<8x32xf32> -> vector<8x32xf32>
    %c0_3 = arith.constant 0 : index
    %c0_4 = arith.constant 0 : index
    %c0_5 = arith.constant 0 : index
    %4 = vector.load %arg3[%c0_3, %c0_4, %c0_5] : memref<3x8x32xf32, #tpu.memory_space<vmem>>, vector<3x8x32xf32>
    %5 = vector.shape_cast %4 : vector<3x8x32xf32> to vector<24x32xf32>
    %6 = arith.truncf %5 : vector<24x32xf32> to vector<24x32xbf16>
    %cst_6 = arith.constant dense<0.000000e+00> : vector<24x32xf32>
    %7 = tpu.matmul %6, %2, %cst_6 {dimension_numbers = #tpu.dot_dimension_numbers<[1], [0], [0], [1], [0, 0, 1, 1], [], []>} : vector<24x32xbf16>, vector<32x32xbf16>, vector<24x32xf32> -> vector<24x32xf32>
    %c0_7 = arith.constant 0 : index
    %c0_8 = arith.constant 0 : index
    %8 = vector.load %arg5[%c0_7, %c0_8] : memref<2x32xf32, #tpu.memory_space<vmem>>, vector<1x32xf32>
    %c1 = arith.constant 1 : index
    %c0_9 = arith.constant 0 : index
    %9 = vector.load %arg5[%c1, %c0_9] : memref<2x32xf32, #tpu.memory_space<vmem>>, vector<1x32xf32>
    %10 = vector.broadcast %8 : vector<1x32xf32> to vector<8x32xf32>
    %11 = arith.mulf %3, %10 : vector<8x32xf32>
    %cst_10 = arith.constant dense<0.000000e+00> : vector<8xf32>
    %12 = vector.multi_reduction <add>, %11, %cst_10 [1] : vector<8x32xf32> to vector<8xf32>
    %13 = vector.shape_cast %12 : vector<8xf32> to vector<8x1xf32>
    %14 = vector.broadcast %9 : vector<1x32xf32> to vector<24x32xf32>
    %15 = arith.mulf %7, %14 : vector<24x32xf32>
    %cst_11 = arith.constant dense<0.000000e+00> : vector<24xf32>
    %16 = vector.multi_reduction <add>, %15, %cst_11 [1] : vector<24x32xf32> to vector<24xf32>
    %17 = vector.shape_cast %16 : vector<24xf32> to vector<24x1xf32>
    %18 = vector.extract_strided_slice %17 {offsets = [0, 0], sizes = [8, 1], strides = [1, 1]} : vector<24x1xf32> to vector<8x1xf32>
    %19 = arith.addf %13, %18 : vector<8x1xf32>
    %cst_12 = arith.constant 0.000000e+00 : f32
    %20 = vector.broadcast %cst_12 : f32 to vector<8x1xf32>
    %21 = arith.cmpf ogt, %19, %20 : vector<8x1xf32>
    %cst_13 = arith.constant 2.000000e-01 : f32
    %22 = vector.broadcast %cst_13 : f32 to vector<8x1xf32>
    %23 = arith.mulf %22, %19 : vector<8x1xf32>
    %24 = arith.select %21, %19, %23 : vector<8x1xi1>, vector<8x1xf32>
    %25 = vector.extract_strided_slice %17 {offsets = [8, 0], sizes = [8, 1], strides = [1, 1]} : vector<24x1xf32> to vector<8x1xf32>
    %26 = arith.addf %13, %25 : vector<8x1xf32>
    %cst_14 = arith.constant 0.000000e+00 : f32
    %27 = vector.broadcast %cst_14 : f32 to vector<8x1xf32>
    %28 = arith.cmpf ogt, %26, %27 : vector<8x1xf32>
    %cst_15 = arith.constant 2.000000e-01 : f32
    %29 = vector.broadcast %cst_15 : f32 to vector<8x1xf32>
    %30 = arith.mulf %29, %26 : vector<8x1xf32>
    %31 = arith.select %28, %26, %30 : vector<8x1xi1>, vector<8x1xf32>
    %32 = vector.extract_strided_slice %17 {offsets = [16, 0], sizes = [8, 1], strides = [1, 1]} : vector<24x1xf32> to vector<8x1xf32>
    %33 = arith.addf %13, %32 : vector<8x1xf32>
    %cst_16 = arith.constant 0.000000e+00 : f32
    %34 = vector.broadcast %cst_16 : f32 to vector<8x1xf32>
    %35 = arith.cmpf ogt, %33, %34 : vector<8x1xf32>
    %cst_17 = arith.constant 2.000000e-01 : f32
    %36 = vector.broadcast %cst_17 : f32 to vector<8x1xf32>
    %37 = arith.mulf %36, %33 : vector<8x1xf32>
    %38 = arith.select %35, %33, %37 : vector<8x1xi1>, vector<8x1xf32>
    %39 = tpu.concatenate %24, %31, %38 in 1 : vector<8x1xf32>, vector<8x1xf32>, vector<8x1xf32> -> vector<8x3xf32>
    %cst_18 = arith.constant dense<0xFF800000> : vector<8xf32>
    %40 = vector.multi_reduction <maximumf>, %39, %cst_18 [1] : vector<8x3xf32> to vector<8xf32>
    %41 = vector.shape_cast %40 : vector<8xf32> to vector<8x1xf32>
    %42 = vector.broadcast %41 : vector<8x1xf32> to vector<8x3xf32>
    %43 = arith.subf %39, %42 : vector<8x3xf32>
    %44 = math.exp %43 : vector<8x3xf32>
    %cst_19 = arith.constant dense<0.000000e+00> : vector<8xf32>
    %45 = vector.multi_reduction <add>, %44, %cst_19 [1] : vector<8x3xf32> to vector<8xf32>
    %46 = vector.shape_cast %45 : vector<8xf32> to vector<8x1xf32>
    %47 = vector.broadcast %46 : vector<8x1xf32> to vector<8x3xf32>
    %48 = arith.divf %44, %47 : vector<8x3xf32>
    %cst_20 = arith.constant 0.000000e+00 : f32
    %49 = vector.broadcast %cst_20 : f32 to vector<8x32xf32>
    %50 = vector.extract_strided_slice %48 {offsets = [0, 0], sizes = [8, 1], strides = [1, 1]} : vector<8x3xf32> to vector<8x1xf32>
    %51 = vector.extract_strided_slice %7 {offsets = [0, 0], sizes = [8, 32], strides = [1, 1]} : vector<24x32xf32> to vector<8x32xf32>
    %52 = vector.broadcast %50 : vector<8x1xf32> to vector<8x32xf32>
    %53 = arith.mulf %52, %51 : vector<8x32xf32>
    %54 = arith.addf %49, %53 : vector<8x32xf32>
    %55 = vector.extract_strided_slice %48 {offsets = [0, 1], sizes = [8, 1], strides = [1, 1]} : vector<8x3xf32> to vector<8x1xf32>
    %56 = vector.extract_strided_slice %7 {offsets = [8, 0], sizes = [8, 32], strides = [1, 1]} : vector<24x32xf32> to vector<8x32xf32>
    %57 = vector.broadcast %55 : vector<8x1xf32> to vector<8x32xf32>
    %58 = arith.mulf %57, %56 : vector<8x32xf32>
    %59 = arith.addf %54, %58 : vector<8x32xf32>
    %60 = vector.extract_strided_slice %48 {offsets = [0, 2], sizes = [8, 1], strides = [1, 1]} : vector<8x3xf32> to vector<8x1xf32>
    %61 = vector.extract_strided_slice %7 {offsets = [16, 0], sizes = [8, 32], strides = [1, 1]} : vector<24x32xf32> to vector<8x32xf32>
    %62 = vector.broadcast %60 : vector<8x1xf32> to vector<8x32xf32>
    %63 = arith.mulf %62, %61 : vector<8x32xf32>
    %64 = arith.addf %59, %63 : vector<8x32xf32>
    %65 = arith.addf %3, %64 : vector<8x32xf32>
    %cst_21 = arith.constant 0.000000e+00 : f32
    %66 = vector.broadcast %cst_21 : f32 to vector<8x32xf32>
    %67 = arith.maximumf %65, %66 : vector<8x32xf32>
    %68 = tpu.transpose %67, [1, 0] : vector<8x32xf32> -> vector<32x8xf32>
    %c0_22 = arith.constant 0 : index
    %c0_23 = arith.constant 0 : index
    %69 = vector.load %arg8[%c0_22, %c0_23] : memref<32x8xf32, #tpu.memory_space<vmem>>, vector<32x8xf32>
    tpu.vector_store %arg8[%c0_22, %c0_23], %68 {strides = array<i32>} : memref<32x8xf32, #tpu.memory_space<vmem>>, vector<32x8xf32>,
    %c8_i32 = arith.constant 8 : i32
    %70 = arith.muli %arg0, %c8_i32 : i32
    %71 = tpu.iota {dimensions = array<i32: 0>} : vector<8x3xi32>
    %72 = vector.broadcast %70 : i32 to vector<8x3xi32>
    %73 = arith.addi %72, %71 : vector<8x3xi32>
    %c0_24 = arith.constant 0 : index
    %74 = memref.load %arg1[%c0_24] : memref<1xi32, #tpu.memory_space<smem>>
    %75 = vector.broadcast %74 : i32 to vector<8x3xi32>
    %76 = arith.cmpi slt, %73, %75 : vector<8x3xi32>
    %cst_25 = arith.constant 0.000000e+00 : f32
    %77 = vector.broadcast %cst_25 : f32 to vector<8x3xf32>
    %78 = arith.select %76, %48, %77 : vector<8x3xi1>, vector<8x3xf32>
    %cst_26 = arith.constant dense<0.000000e+00> : vector<3xf32>
    %79 = vector.multi_reduction <add>, %78, %cst_26 [0] : vector<8x3xf32> to vector<3xf32>
    %80 = vector.shape_cast %79 : vector<3xf32> to vector<1x3xf32>
    %81 = vector.shape_cast %80 : vector<1x3xf32> to vector<1x1x3xf32>
    %c0_27 = arith.constant 0 : index
    %c0_28 = arith.constant 0 : index
    %c0_29 = arith.constant 0 : index
    %82 = vector.load %arg9[%c0_27, %c0_28, %c0_29] : memref<1x1x3xf32, #tpu.memory_space<vmem>>, vector<1x1x3xf32>
    tpu.vector_store %arg9[%c0_27, %c0_28, %c0_29], %81 {strides = array<i32>} : memref<1x1x3xf32, #tpu.memory_space<vmem>>, vector<1x1x3xf32>,
    %c0_30 = arith.constant 0 : index
    %c0_31 = arith.constant 0 : index
    %83 = vector.load %arg6[%c0_30, %c0_31] : memref<32x2xf32, #tpu.memory_space<vmem>>, vector<32x2xf32>
    %cst_32 = arith.constant dense<0.000000e+00> : vector<8x2xf32>
    %84 = tpu.matmul %0, %83, %cst_32 {dimension_numbers = #tpu.dot_dimension_numbers<[1], [0], [0], [1], [0, 0, 1, 1], [], []>} : vector<8x32xf32>, vector<32x2xf32>, vector<8x2xf32> -> vector<8x2xf32>
    %c0_33 = arith.constant 0 : index
    %c0_34 = arith.constant 0 : index
    %85 = vector.load %arg7[%c0_33, %c0_34] : memref<1x2xf32, #tpu.memory_space<vmem>>, vector<1x2xf32>
    %86 = vector.broadcast %85 : vector<1x2xf32> to vector<8x2xf32>
    %87 = arith.addf %84, %86 : vector<8x2xf32>
    %c0_35 = arith.constant 0 : index
    %c0_36 = arith.constant 0 : index
    %88 = vector.load %arg10[%c0_35, %c0_36] : memref<8x2xf32, #tpu.memory_space<vmem>>, vector<8x2xf32>
    tpu.vector_store %arg10[%c0_35, %c0_36], %87 {strides = array<i32>} : memref<8x2xf32, #tpu.memory_space<vmem>>, vector<8x2xf32>,
    return
  }
  func.func @transform_0(%arg0: i32, %arg1: memref<1xi32, #tpu.memory_space<smem>>) -> (i32, i32) {
    %c0_i32 = arith.constant 0 : i32
    %c0_i32_0 = arith.constant 0 : i32
    return %arg0, %c0_i32 : i32, i32
  }
  func.func @transform_1(%arg0: i32, %arg1: memref<1xi32, #tpu.memory_space<smem>>) -> (i32, i32, i32) {
    %c0_i32 = arith.constant 0 : i32
    %c0_i32_0 = arith.constant 0 : i32
    %c0_i32_1 = arith.constant 0 : i32
    return %c0_i32, %arg0, %c0_i32_0 : i32, i32, i32
  }
  func.func @transform_2(%arg0: i32, %arg1: memref<1xi32, #tpu.memory_space<smem>>) -> (i32, i32) {
    %c0_i32 = arith.constant 0 : i32
    %c0_i32_0 = arith.constant 0 : i32
    %c0_i32_1 = arith.constant 0 : i32
    return %c0_i32, %c0_i32_0 : i32, i32
  }
  func.func @transform_3(%arg0: i32, %arg1: memref<1xi32, #tpu.memory_space<smem>>) -> (i32, i32) {
    %c0_i32 = arith.constant 0 : i32
    %c0_i32_0 = arith.constant 0 : i32
    %c0_i32_1 = arith.constant 0 : i32
    return %c0_i32, %c0_i32_0 : i32, i32
  }
  func.func @transform_4(%arg0: i32, %arg1: memref<1xi32, #tpu.memory_space<smem>>) -> (i32, i32) {
    %c0_i32 = arith.constant 0 : i32
    %c0_i32_0 = arith.constant 0 : i32
    %c0_i32_1 = arith.constant 0 : i32
    return %c0_i32, %c0_i32_0 : i32, i32
  }
  func.func @transform_5(%arg0: i32, %arg1: memref<1xi32, #tpu.memory_space<smem>>) -> (i32, i32) {
    %c0_i32 = arith.constant 0 : i32
    %c0_i32_0 = arith.constant 0 : i32
    %c0_i32_1 = arith.constant 0 : i32
    return %c0_i32, %c0_i32_0 : i32, i32
  }
  func.func @transform_6(%arg0: i32, %arg1: memref<1xi32, #tpu.memory_space<smem>>) -> (i32, i32) {
    %c0_i32 = arith.constant 0 : i32
    %c0_i32_0 = arith.constant 0 : i32
    return %c0_i32, %arg0 : i32, i32
  }
  func.func @transform_7(%arg0: i32, %arg1: memref<1xi32, #tpu.memory_space<smem>>) -> (i32, i32, i32) {
    %c0_i32 = arith.constant 0 : i32
    %c0_i32_0 = arith.constant 0 : i32
    %c0_i32_1 = arith.constant 0 : i32
    return %arg0, %c0_i32, %c0_i32_0 : i32, i32, i32
  }
  func.func @transform_8(%arg0: i32, %arg1: memref<1xi32, #tpu.memory_space<smem>>) -> (i32, i32) {
    %c0_i32 = arith.constant 0 : i32
    %c0_i32_0 = arith.constant 0 : i32
    return %arg0, %c0_i32 : i32, i32
  }
}

</mosaic_0001>

<llo_original>
// kernel: tpu_custom_call.1
$region0: #{tpu_custom_call.1}
  #allocation0 [shape = 'u32[]', space=smem, size = 0x4, offset = 0x4, fixed_abs, tag = 'smem constant byte address 0x4 - core index']
  #allocation1 [shape = 'u32[72,128]{1,0:T(1,128)}', space=vmem, size = 0x9000, scoped, tag = 'internal scratch']
  #allocation2 [shape = 's32[1]{0}', space=sflag, size = 0x4, scoped, tag = 'scoped memory for tpu_custom_call.1']
  #allocation3 [shape = 's32[1]{0:T(128)S(6)}', space=smem, size = 0x200, scoped, tag = 'prefetched SMEM operand 0']
  %s0 = inlined_call_operand.<no memory space> [shape: s32[1], index: 0, kind: input, shape index: {}]
  %s1 = inlined_call_operand.vmem [shape: f32[8,32], index: 1, kind: input, shape index: {}]
  %s2 = inlined_call_operand.vmem [shape: f32[3,8,32], index: 2, kind: input, shape index: {}]
  %s3 = inlined_call_operand.hbm [shape: bf16[32,32], index: 3, kind: input, shape index: {}]
  %s4 = inlined_call_operand.vmem [shape: f32[2,32], index: 4, kind: input, shape index: {}]
  %s5 = inlined_call_operand.vmem [shape: f32[32,2], index: 5, kind: input, shape index: {}]
  %s6 = inlined_call_operand.vmem [shape: f32[1,2], index: 6, kind: input, shape index: {}]
  %s7 = inlined_call_operand.vmem [shape: f32[32,8], index: 7, kind: output, shape index: {0}]
  %s8 = inlined_call_operand.hbm [shape: f32[1,1,3], index: 8, kind: output, shape index: {1}]
  %s9 = inlined_call_operand.vmem [shape: f32[8,2], index: 9, kind: output, shape index: {2}]
  %10 = xla_tuple %s7, %s8, %s9
  %s11 = sld [smem:[#allocation0]]
  $region54: #{tpu_custom_call.1} parent=0
    _
  %s13 = ssub.s32 1, %s11
  %s14 = scalar_select 0, %s13, %s11
  %15 = sst [smem:[#allocation3]] %s0
  $region1: #{tpu_custom_call.1} parent=0
    #allocation4 [shape = 'u8[8192]{0}', space=vmem, size = 0x2000, scoped, tag = 'input window, operand 3, single buffered']
    #allocation5 [shape = 's32[1]{0}', space=sflag, size = 0x4, scoped, tag = 'scoped memory for tpu_custom_call.1']
    #allocation6 [shape = 's32[1]{0}', space=sflag, size = 0x4, scoped, tag = 'scoped memory for tpu_custom_call.1']
    #allocation7 [shape = 'u8[512]{0}', space=vmem, size = 0x400, scoped, tag = 'output window, operand 1, single buffered']
    %16 = vsyncpa [#allocation5], 0
    %17 = vsyncpa [#allocation6], 0
    // Predicated region
    $region2: #{tpu_custom_call.1} parent=1 // pred_check
      _
    $region3: #{tpu_custom_call.1} parent=1 // pred_check_branch
      %19 = sbr.rel (0) target = $region5
    $region4: #{tpu_custom_call.1} parent=1 // pred_region
      _
    $region5: #{tpu_custom_call.1} parent=1 // pred_fallthru
      _
    // Predicated region
    $region6: #{tpu_custom_call.1} parent=1 // pred_check
      _
    $region7: #{tpu_custom_call.1} parent=1 // pred_check_branch
      %21 = sbr.rel (0) target = $region9
    $region8: #{tpu_custom_call.1} parent=1 // pred_region
      _
    $region9: #{tpu_custom_call.1} parent=1 // pred_fallthru
      _
    // Predicated region
    $region10: #{tpu_custom_call.1} parent=1 // pred_check
      _
    $region11: #{tpu_custom_call.1} parent=1 // pred_check_branch
      %23 = sbr.rel (0) target = $region13
    $region12: #{tpu_custom_call.1} parent=1 // pred_region
      %25 = vsyncadd [#allocation5], 0
      %s26 = sshll.u32 %s3, 4
      %s27 = int_to_ptr.hbm [resolvable:$true] %s26
      %s28 = sshll.u32 [#allocation4], 4
      %s29 = int_to_ptr.vmem [resolvable:$true] %s28
      %34 = dma.hbm_to_vmem [thread:$0]  %s27, 256, %s29, [#allocation5], 64, 64, 4
    $region13: #{tpu_custom_call.1} parent=1 // pred_fallthru
      _
    // Predicated region
    $region14: #{tpu_custom_call.1} parent=1 // pred_check
      _
    $region15: #{tpu_custom_call.1} parent=1 // pred_check_branch
      %36 = sbr.rel (0) target = $region17
    $region16: #{tpu_custom_call.1} parent=1 // pred_region
      _
    $region17: #{tpu_custom_call.1} parent=1 // pred_fallthru
      _
    // Predicated region
    $region18: #{tpu_custom_call.1} parent=1 // pred_check
      _
    $region19: #{tpu_custom_call.1} parent=1 // pred_check_branch
      %38 = sbr.rel (0) target = $region21
    $region20: #{tpu_custom_call.1} parent=1 // pred_region
      _
    $region21: #{tpu_custom_call.1} parent=1 // pred_fallthru
      _
    // Predicated region
    $region22: #{tpu_custom_call.1} parent=1 // pred_check
      _
    $region23: #{tpu_custom_call.1} parent=1 // pred_check_branch
      %40 = sbr.rel (0) target = $region25
    $region24: #{tpu_custom_call.1} parent=1 // pred_region
      _
    $region25: #{tpu_custom_call.1} parent=1 // pred_fallthru
      _
    // Predicated region
    $region26: #{tpu_custom_call.1} parent=1 // pred_check
      _
    $region27: #{tpu_custom_call.1} parent=1 // pred_check_branch
      %42 = sbr.rel (0) target = $region29
    $region28: #{tpu_custom_call.1} parent=1 // pred_region
      %44 = dma.done [#allocation5], 256
    $region29: #{tpu_custom_call.1} parent=1 // pred_fallthru
      _
    %v46 = vld [vmem:[%s1] sm:$0xff]
    %v47 = vpack.c.bf16 %v46, %v46
    %v48 = vld [vmem:[#allocation4] sm:$0xf]
    %v49 = vld [vmem:[#allocation4 + $0x4] sm:$0xf]
    %v50 = vld [vmem:[#allocation4 + $0x8] sm:$0xf]
    %v51 = vld [vmem:[#allocation4 + $0xc] sm:$0xf]
    %v56 = vunpack.c.l.b16 %v48
    %v57 = vunpack.c.l.b16 %v49
    %v58 = vunpack.c.l.b16 %v50
    %v59 = vunpack.c.l.b16 %v51
    %v60 = vpack.c.b16 %v57, %v56
    %v61 = vpack.c.b16 %v59, %v58
    %vm64 = vcmask 261120
    %v66 = vsel %vm64, %v47, 0
    %68 = vmatpush.bf16.msra.mxu0 0
    %69 = vmatpush.bf16.msra.mxu0 0
    %70 = vmatpush.bf16.msra.mxu0 0
    %71 = vmatpush.bf16.msra.mxu0 0
    %72 = vmatpush.bf16.msra.mxu0 0
    %73 = vmatpush.bf16.msra.mxu0 0
    %74 = vmatpush.bf16.msra.mxu0 %v61
    %75 = vmatpush.bf16.msra.mxu0 %v60
    %76 = vmatmul.bf16.gmra.mxu0 %v66
    %v77 = vpop.f32.mrf.mxu0
    %v78 = vadd.f32 0.0, %v77
    %v79 = vpop.f32.mrf.mxu0
    %80 = vdwg.mxu0
    %v81 = vld [vmem:[%s2] sm:$0xff]
    %v82 = vld [vmem:[%s2 + $0x8] sm:$0xff]
    %v83 = vld [vmem:[%s2 + $0x10] sm:$0xff]
    %v84 = vpack.c.bf16 %v82, %v81
    %v85 = vpack.c.bf16 %v83, %v83
    %v87 = vsel %vm64, %v84, 0
    %v90 = vsel %vm64, %v85, 0
    %92 = vmatpush.bf16.msra.mxu0 0
    %93 = vmatpush.bf16.msra.mxu0 0
    %94 = vmatpush.bf16.msra.mxu0 0
    %95 = vmatpush.bf16.msra.mxu0 0
    %96 = vmatpush.bf16.msra.mxu0 0
    %97 = vmatpush.bf16.msra.mxu0 0
    %98 = vmatpush.bf16.msra.mxu0 %v61
    %99 = vmatpush.bf16.msra.mxu0 %v60
    %100 = vmatmul.bf16.gmra.mxu0 %v87
    %v101 = vpop.f32.mrf.mxu0
    %v102 = vadd.f32 0.0, %v101
    %v103 = vpop.f32.mrf.mxu0
    %v104 = vadd.f32 0.0, %v103
    %105 = vmatmul.bf16.gmra.mxu0 %v90
    %v106 = vpop.f32.mrf.mxu0
    %v107 = vadd.f32 0.0, %v106
    %v108 = vpop.f32.mrf.mxu0
    %109 = vdwg.mxu0
    %v110 = vld [vmem:[%s4] sm:$0x1]
    %v111 = vld [vmem:[%s4 + $0x1] sm:$0x1]
    %v112 = vperm.slane %v110, 0
    %v113 = vmul.f32 %v78, %v112
    %v114 = vsel %vm64, %v113, 0.0
    %115 = vadd.xlane.f32.xlu0 %v114
    %v116 = vpop.xlane.xlu0 %115
    %v117 = vperm.slane %v111, 0
    %v118 = vmul.f32 %v102, %v117
    %v119 = vmul.f32 %v104, %v117
    %v120 = vmul.f32 %v107, %v117
    %v121 = vsel %vm64, %v118, 0.0
    %122 = vadd.xlane.f32.xlu0 %v121
    %v123 = vpop.xlane.xlu0 %122
    %v124 = vsel %vm64, %v119, 0.0
    %125 = vadd.xlane.f32.xlu0 %v124
    %v126 = vpop.xlane.xlu0 %125
    %v127 = vsel %vm64, %v120, 0.0
    %128 = vadd.xlane.f32.xlu0 %v127
    %v129 = vpop.xlane.xlu0 %128
    %v130 = vadd.f32 %v116, %v123
    %vm131 = vcmp.gt.f32.partialorder %v130, 0.0
    %v132 = vmul.f32 %v130, 0.2
    %v133 = vsel %vm131, %v130, %v132
    %v134 = vadd.f32 %v116, %v126
    %vm135 = vcmp.gt.f32.partialorder %v134, 0.0
    %v136 = vmul.f32 %v134, 0.2
    %v137 = vsel %vm135, %v134, %v136
    %v138 = vadd.f32 %v116, %v129
    %vm139 = vcmp.gt.f32.partialorder %v138, 0.0
    %v140 = vmul.f32 %v138, 0.2
    %v141 = vsel %vm139, %v138, %v140
    %vm142 = vcmask 7168
    %v143 = vsel %vm142, %v133, %v137
    %vm144 = vcmask 15360
    %v145 = vsel %vm144, %v143, %v141
    %vm146 = vcmask 23552
    %v147 = vsel %vm146, %v145, -inf
    %148 = vmax.xlane.f32.xlu0 %v147
    %v149 = vpop.xlane.xlu0 %148
    %v150 = vsub.f32 %v145, %v149
    %v151 = vmul.f32 %v150, 1.442695
    %v152 = vpow.pop %v151
    %v153 = vsel %vm146, %v152, 0.0
    %154 = vadd.xlane.f32.xlu0 %v153
    %v155 = vpop.xlane.xlu0 %154
    %v156 = vrcp.pop %v155
    %v157 = vmul.f32 %v155, %v156
    %v158 = vsub.f32 1.0, %v157
    %v159 = vmul.f32 %v156, %v158
    %v160 = vadd.f32 %v156, %v159
    %vm161 = vweird.f32 %v155
    %vm162 = vweird.f32 %v156
    %vm163 = vmor %vm161, %vm162
    %v164 = vsel %vm163, %v156, %v160
    %v165 = vand.u32 2147483647, %v155
    %vm166 = vcmp.eq.f32.partialorder %v165, 8.507059e+37
    %v167 = vand.u32 %v155, 2147483648
    %v168 = vor.u32 1.1754944e-38, %v167
    %v169 = vsel %vm166, %v168, %v164
    %v170 = vmul.f32 %v152, %v169
    %172 = vset.pattern.permute.xlu0 0
    %173 = vperm.xlu0 %172, %v170
    %v174 = vpop.permute.xlu0 %173
    %v176 = vmul.f32 %v174, %v102
    %v177 = vadd.f32 %v176, 0.0
    %178 = vset.pattern.permute.xlu0 1
    %179 = vperm.xlu0 %178, %v170
    %v180 = vpop.permute.xlu0 %179
    %v182 = vmul.f32 %v180, %v104
    %v183 = vadd.f32 %v177, %v182
    %184 = vset.pattern.permute.xlu0 2
    %185 = vperm.xlu0 %184, %v170
    %v186 = vpop.permute.xlu0 %185
    %v188 = vmul.f32 %v186, %v107
    %v189 = vadd.f32 %v183, %v188
    %v190 = vadd.f32 %v78, %v189
    %v191 = vmax.f32 %v190, 0.0
    %192 = vxpose.xlu0.b32.start [1/16] %v191, 128
    %193 = vxpose.xlu0.b32.cont [2/16] 0.0, 128
    %194 = vxpose.xlu0.b32.cont [3/16] 0.0, 128
    %195 = vxpose.xlu0.b32.cont [4/16] 0.0, 128
    %196 = vxpose.xlu0.b32.cont [5/16] 0.0, 128
    %197 = vxpose.xlu0.b32.cont [6/16] 0.0, 128
    %198 = vxpose.xlu0.b32.cont [7/16] 0.0, 128
    %199 = vxpose.xlu0.b32.cont [8/16] 0.0, 128
    %200 = vxpose.xlu0.b32.cont [9/16] 0.0, 128
    %201 = vxpose.xlu0.b32.cont [10/16] 0.0, 128
    %202 = vxpose.xlu0.b32.cont [11/16] 0.0, 128
    %203 = vxpose.xlu0.b32.cont [12/16] 0.0, 128
    %204 = vxpose.xlu0.b32.cont [13/16] 0.0, 128
    %205 = vxpose.xlu0.b32.cont [14/16] 0.0, 128
    %206 = vxpose.xlu0.b32.cont [15/16] 0.0, 128
    %207 = vxpose.xlu0.b32.end [16/16] 0.0, 128
    %v208 = vpop.trf.xlu0
    %v209 = vpop.trf.xlu0
    %v210 = vpop.trf.xlu0
    %v211 = vpop.trf.xlu0
    %v212 = vpop.trf.xlu0
    %v213 = vpop.trf.xlu0
    %v214 = vpop.trf.xlu0
    %v215 = vpop.trf.xlu0
    %v216 = vpop.trf.xlu0
    %v217 = vpop.trf.xlu0
    %v218 = vpop.trf.xlu0
    %v219 = vpop.trf.xlu0
    %v220 = vpop.trf.xlu0
    %v221 = vpop.trf.xlu0
    %v222 = vpop.trf.xlu0
    %v223 = vpop.trf.xlu0
    %vm224 = vcmask 64512
    %225 = vst.msk [vmem:[%s7] sm:$0xff] %vm224, %v208
    %226 = vst.msk [vmem:[%s7 + $0x8] sm:$0xff] %vm224, %v209
    %227 = vst.msk [vmem:[%s7 + $0x10] sm:$0xff] %vm224, %v210
    %228 = vst.msk [vmem:[%s7 + $0x18] sm:$0xff] %vm224, %v211
    %s229 = smul.u32 0, 8
    %v230 = vlaneseq
    %v231 = vshrl.u32 %v230, 7
    %v232 = vstv %s229
    %v233 = vadd.s32 %v232, %v231
    %s234 = sld [smem:[#allocation3]]
    %v235 = vstv %s234
    %vm236 = vcmp.lt.s32.totalorder %v233, %v235
    %v237 = vsel %vm236, %v170, 0.0
    %v238 = vsel %vm146, %v237, 0.0
    %v239 = vrot.slane %v238, 4
    %v240 = vadd.f32 %v238, %v239
    %v241 = vrot.slane %v240, 2
    %v242 = vadd.f32 %v240, %v241
    %v243 = vrot.slane %v242, 1
    %v244 = vadd.f32 %v242, %v243
    %vm245 = vcmask 16384
    %246 = vst.msk [vmem:[#allocation7] sm:$0x1] %vm245, %v244
    %v247 = vld [vmem:[%s5] sm:$0xff]
    %v248 = vld [vmem:[%s5 + $0x8] sm:$0xff]
    %v249 = vld [vmem:[%s5 + $0x10] sm:$0xff]
    %v250 = vld [vmem:[%s5 + $0x18] sm:$0xff]
    %v251 = vld [vmem:[%s6] sm:$0x1]
    %v253 = vperm.slane %v251, 0
    %v256 = vsel %vm64, %v46, 0
    %258 = vmatpush.msra.mxu0 0.0
    %259 = vmatpush.msra.mxu0 0.0
    %260 = vmatpush.msra.mxu0 0.0
    %261 = vmatpush.msra.mxu0 0.0
    %262 = vmatpush.msra.mxu0 0.0
    %263 = vmatpush.msra.mxu0 0.0
    %264 = vmatpush.msra.mxu0 0.0
    %265 = vmatpush.msra.mxu0 0.0
    %266 = vmatpush.msra.mxu0 0.0
    %267 = vmatpush.msra.mxu0 0.0
    %268 = vmatpush.msra.mxu0 0.0
    %269 = vmatpush.msra.mxu0 0.0
    %270 = vmatpush.msra.mxu0 %v250
    %271 = vmatpush.msra.mxu0 %v249
    %272 = vmatpush.msra.mxu0 %v248
    %273 = vmatpush.msra.mxu0 %v247
    %274 = vmatmul.f32.gmra.mxu0 %v256
    %v275 = vpop.f32.mrf.mxu0
    %v276 = vadd.f32 %v253, %v275
    %277 = vdwg.mxu0
    %278 = vst.msk [vmem:[%s9] sm:$0xff] %vm144, %v276
    // Predicated region
    $region30: #{tpu_custom_call.1} parent=1 // pred_check
      _
    $region31: #{tpu_custom_call.1} parent=1 // pred_check_branch
      %280 = sbr.rel (0) target = $region33
    $region32: #{tpu_custom_call.1} parent=1 // pred_region
      _
    $region33: #{tpu_custom_call.1} parent=1 // pred_fallthru
      _
    // Predicated region
    $region34: #{tpu_custom_call.1} parent=1 // pred_check
      _
    $region35: #{tpu_custom_call.1} parent=1 // pred_check_branch
      %282 = sbr.rel (0) target = $region37
    $region36: #{tpu_custom_call.1} parent=1 // pred_region
      %284 = vsyncadd [#allocation6], 0
      %s286 = sshll.u32 [#allocation7], 4
      %s287 = int_to_ptr.vmem [resolvable:$true] %s286
      %s288 = sshll.u32 %s8, 4
      %s289 = int_to_ptr.hbm [resolvable:$true] %s288
      %291 = dma.vmem_to_hbm [thread:$0]  %s287, 16, %s289, [#allocation6]
    $region37: #{tpu_custom_call.1} parent=1 // pred_fallthru
      _
    // Predicated region
    $region38: #{tpu_custom_call.1} parent=1 // pred_check
      _
    $region39: #{tpu_custom_call.1} parent=1 // pred_check_branch
      %293 = sbr.rel (0) target = $region41
    $region40: #{tpu_custom_call.1} parent=1 // pred_region
      _
    $region41: #{tpu_custom_call.1} parent=1 // pred_fallthru
      _
    // Predicated region
    $region42: #{tpu_custom_call.1} parent=1 // pred_check
      _
    $region43: #{tpu_custom_call.1} parent=1 // pred_check_branch
      %295 = sbr.rel (0) target = $region45
    $region44: #{tpu_custom_call.1} parent=1 // pred_region
      _
    $region45: #{tpu_custom_call.1} parent=1 // pred_fallthru
      _
    // Predicated region
    $region46: #{tpu_custom_call.1} parent=1 // pred_check
      _
    $region47: #{tpu_custom_call.1} parent=1 // pred_check_branch
      %297 = sbr.rel (0) target = $region49
    $region48: #{tpu_custom_call.1} parent=1 // pred_region
      %299 = dma.done [#allocation6], 16
    $region49: #{tpu_custom_call.1} parent=1 // pred_fallthru
      _
    // Predicated region
    $region50: #{tpu_custom_call.1} parent=1 // pred_check
      _
    $region51: #{tpu_custom_call.1} parent=1 // pred_check_branch
      %301 = sbr.rel (0) target = $region53
    $region52: #{tpu_custom_call.1} parent=1 // pred_region
      _
    $region53: #{tpu_custom_call.1} parent=1 // pred_fallthru
      _
    %302 = vsyncpa [#allocation5], 1
    %303 = vsyncpa [#allocation6], 1

</llo_original>
